<compile_context>
chip_gen: v5e
topology: v5e:2x2
jax: 0.10.0
libtpu: 0.0.40
codegen_flags: <defaults>
</compile_context>

<pallas_src>
import jax
import jax.numpy as jnp
from jax.experimental import pallas as pl
from jax.experimental.pallas import tpu as pltpu


def _attention_kernel(x_ref, w_ref, b_ref, va_ref, ctx_ref, wts_ref):
    """One batch block.

    x_ref:   (Bt, S, H)  input tile
    w_ref:   (H, H)      fused weight, already (Wa_w + Ua_w)^T  -> (H_in, H_out)
    b_ref:   (1, H)      fused bias   (Wa_b + Ua_b)
    va_ref:  (H, 1)      scoring vector as a column (MXU matvec)
    ctx_ref: (Bt, H)     context output tile
    wts_ref: (Bt, S)     attention-weights output tile
    """
    bt, S, H = x_ref.shape
    x = x_ref[...]                                             # (Bt, S, H)

    # ---- fused projection on the MXU: tanh(x @ (Wa+Ua)^T + (ba+bu)) --------------
    # Flatten the batch block into rows so one matmul feeds Bt*S MXU rows.
    # (Leading-dim reshape: the lane (H) dim is untouched -> no relayout cost.)
    x2 = x.reshape(bt * S, H)
    s = jnp.tanh(
        jnp.dot(x2.astype(w_ref.dtype), w_ref[...],
                preferred_element_type=jnp.float32)
        + b_ref[...])                                          # (Bt*S, H) f32

    # ---- scores on the MXU: (Bt*S, H) @ (H, 1) ------------------------------------
    scores = jnp.dot(s, va_ref[...],
                     preferred_element_type=jnp.float32)       # (Bt*S, 1)
    # Layout plumbing: put the sequence axis on lanes (flash-attention style) so the
    # softmax reductions and the weights store are lane-major. Swapping against a unit
    # dim is the batched analogue of the old per-batch (S, 1).T and is a cheap relayout.
    scores = jnp.swapaxes(scores.reshape(bt, S, 1), 1, 2)      # (Bt, 1, S)

    # ---- softmax over the sequence axis (dim=1 of the (B, S) scores) --------------
    m = jnp.max(scores, axis=-1, keepdims=True)                # (Bt, 1, 1)
    e = jnp.exp(scores - m)                                    # (Bt, 1, S)
    denom = jnp.sum(e, axis=-1, keepdims=True)                 # (Bt, 1, 1)
    inv = pl.reciprocal(denom, approx=True)                    # EUP slot, not a VPU divide
    inv = inv * (2.0 - denom * inv)                            # one Newton step -> ~f32 exact
    w = e * inv                                                # (Bt, 1, S)

    # ---- context on the MXU: (Bt, 1, S) x (Bt, S, H) -> (Bt, 1, H) ------------------
    ctx = jnp.einsum('bqs,bsh->bqh', w.astype(x.dtype), x,
                     preferred_element_type=jnp.float32)       # (Bt, 1, H)

    ctx_ref[...] = ctx[:, 0, :].astype(ctx_ref.dtype)          # (Bt, H) tile
    wts_ref[...] = w[:, 0, :].astype(wts_ref.dtype)            # (Bt, S) lane-major tile


def _choose_batch_block(B, S, H, itemsize, tile_budget_bytes=16 * 1024 * 1024):
    """Pick the batch-block size Bt.

    Goals: (a) Bt*S >= ~256 rows so the fused matmul fills the MXU height on v6e/v7x
    (128 already suffices on v5e), (b) the double-buffered x tile plus outputs stays
    well inside the v7x VMEM budget (64 MiB physical, 32 MiB default scoped limit),
    (c) Bt divides B so every block is full.
    """
    best = 1
    for bt in range(1, B + 1):
        if B % bt:
            continue
        # 2x for Pallas double-buffering of the streamed input tile + output tiles.
        bytes_needed = 2 * bt * (S * H + H + S) * itemsize
        if bytes_needed > tile_budget_bytes:
            break
        best = bt
        if bt * S >= 256:   # enough MXU rows; keep some grid extent (megacore-friendly)
            break
    return best


def attention_pallas(lstm_output, wa_w, wa_b, ua_w, ua_b, va, *,
                     use_bf16_matmul=False):
    """lstm_output: (B, S, H). Returns (context (B, H), weights (B, S))."""
    B, S, H = lstm_output.shape
    itemsize = jnp.dtype(lstm_output.dtype).itemsize

    # Algebraic fusion (exact): Wa(x) + Ua(x) == x @ (Wa_w + Ua_w)^T + (Wa_b + Ua_b).
    # Pre-add and pre-transpose once here -> a single resident (H, H) weight, no
    # in-kernel .T, half the matmul FLOPs and half the weight DMA bytes.
    w_fused = (wa_w + ua_w).T                      # (H_in, H_out)
    b_fused = (wa_b + ua_b).reshape(1, H)
    va_col = va.reshape(H, 1)
    if use_bf16_matmul:
        # Optional (biggest relative win on v5e's bf16-native MXU): halves weight bytes
        # and MXU passes. Off by default to preserve tight f32 parity with the reference.
        w_fused = w_fused.astype(jnp.bfloat16)

    bt = _choose_batch_block(B, S, H, itemsize)
    grid = (B // bt,)
    # NOTE(v7x): the batch axis is "parallel"; an even grid extent lets Mosaic shard the
    # blocks across both TensorCores. At the test size the whole batch is one tiny step.

    # Explicit VMEM budget: streamed x tile + output tiles (double-buffered) + the
    # grid-invariant fused weight/bias/va. Capped at 32 MiB so it is valid on every
    # generation (v7x physical VMEM is 64 MiB). For very large H, tile the K dimension
    # of the matmul instead of holding the full (H, H) weight resident.
    weight_bytes = (H * H + 2 * H) * itemsize
    tile_bytes = 2 * bt * (S * H + H + S) * itemsize
    vmem_limit = int(min(max(4 * 1024 * 1024, 2 * (weight_bytes + tile_bytes)),
                         32 * 1024 * 1024))

    out_shapes = (
        jax.ShapeDtypeStruct((B, H), lstm_output.dtype),   # context
        jax.ShapeDtypeStruct((B, S), lstm_output.dtype),   # weights
    )

    return pl.pallas_call(
        _attention_kernel,
        out_shape=out_shapes,
        grid_spec=pltpu.PrefetchScalarGridSpec(
            num_scalar_prefetch=0,
            grid=grid,
            in_specs=[
                pl.BlockSpec((bt, S, H), lambda i: (i, 0, 0)),   # per-block x tile
                # The three operands below are grid-invariant (constant index_map), so
                # Pallas keeps reusing the same block. With large H and many grid steps
                # they could additionally be single-buffered (pipeline_mode=pl.Buffered(1))
                # to halve their VMEM footprint; at these sizes (grid extent 1) it is moot.
                pl.BlockSpec((H, H), lambda i: (0, 0)),          # fused (Wa+Ua)^T
                pl.BlockSpec((1, H), lambda i: (0, 0)),          # fused bias
                pl.BlockSpec((H, 1), lambda i: (0, 0)),          # va column
            ],
            out_specs=[
                pl.BlockSpec((bt, H), lambda i: (i, 0)),         # context tile
                pl.BlockSpec((bt, S), lambda i: (i, 0)),         # weights tile
            ],
        ),
        compiler_params=pltpu.CompilerParams(
            dimension_semantics=("parallel",),
            vmem_limit_bytes=vmem_limit),
    )(lstm_output, w_fused, b_fused, va_col)


def attention_ref(lstm_output, wa_w, wa_b, ua_w, ua_b, va):
    """Pure-JAX reference mirroring the PyTorch forward exactly."""
    s = jnp.tanh(lstm_output @ wa_w.T + wa_b + lstm_output @ ua_w.T + ua_b)
    scores = s @ va
    weights = jax.nn.softmax(scores, axis=1)
    context = jnp.sum(weights[..., None] * lstm_output, axis=1)
    return context, weights


if __name__ == "__main__":
    B, S, H = 2, 8, 32
    key = jax.random.PRNGKey(0)
    kx, kw1, kb1, kw2, kb2, kv = jax.random.split(key, 6)

    # Deterministic synthetic parameters (shapes per nn.Linear(H, H) and va = randn(H)).
    lstm_output = jax.random.normal(kx, (B, S, H), dtype=jnp.float32)
    wa_w = jax.random.normal(kw1, (H, H), dtype=jnp.float32) * 0.1
    wa_b = jax.random.normal(kb1, (H,), dtype=jnp.float32) * 0.1
    ua_w = jax.random.normal(kw2, (H, H), dtype=jnp.float32) * 0.1
    ua_b = jax.random.normal(kb2, (H,), dtype=jnp.float32) * 0.1
    va = jax.random.normal(kv, (H,), dtype=jnp.float32)

    ctx, wts = attention_pallas(lstm_output, wa_w, wa_b, ua_w, ua_b, va)
    jax.block_until_ready((ctx, wts))

    ctx_ref_v, wts_ref_v = attention_ref(lstm_output, wa_w, wa_b, ua_w, ua_b, va)
    assert ctx.shape == (B, H) and wts.shape == (B, S)
    # Tolerance 1e-4 (was 1e-5): the fused (Wa+Ua) weight reassociates f32 rounding and
    # the softmax denominator uses the EUP approximate reciprocal + one Newton step.
    assert jnp.allclose(ctx, ctx_ref_v, atol=1e-4, rtol=1e-4)
    assert jnp.allclose(wts, wts_ref_v, atol=1e-4, rtol=1e-4)
    assert jnp.allclose(jnp.sum(wts, axis=1), 1.0, atol=1e-4)

    print("KERNEL_OK")
</pallas_src>

<mosaic_0001>
module attributes {stable_mosaic.version = 11 : i64} {
  func.func @_attention_kernel(%arg0: i32, %arg1: memref<2x8x32xf32, #tpu.memory_space<vmem>>, %arg2: memref<32x32xf32, #tpu.memory_space<vmem>>, %arg3: memref<1x32xf32, #tpu.memory_space<vmem>>, %arg4: memref<32x1xf32, #tpu.memory_space<vmem>>, %arg5: memref<2x32xf32, #tpu.memory_space<vmem>>, %arg6: memref<2x8xf32, #tpu.memory_space<vmem>>) attributes {dimension_semantics = [#tpu.dimension_semantics<parallel>], iteration_bounds = array<i64: 1>, scalar_prefetch = 0 : i64, scratch_operands = 0 : i64, tpu.core_type = #tpu.core_type<tc>, window_params = [{transform_indices = @transform_0, window_bounds = array<i64: 2, 8, 32>}, {pipeline_mode = #tpu.pipeline_mode<synchronous>, transform_indices = @transform_1, window_bounds = array<i64: 32, 32>}, {pipeline_mode = #tpu.pipeline_mode<synchronous>, transform_indices = @transform_2, window_bounds = array<i64: 1, 32>}, {pipeline_mode = #tpu.pipeline_mode<synchronous>, transform_indices = @transform_3, window_bounds = array<i64: 32, 1>}, {transform_indices = @transform_4, window_bounds = array<i64: 2, 32>}, {transform_indices = @transform_5, window_bounds = array<i64: 2, 8>}]} {
    %c0 = arith.constant 0 : index
    %c0_0 = arith.constant 0 : index
    %c0_1 = arith.constant 0 : index
    %0 = vector.load %arg1[%c0, %c0_0, %c0_1] : memref<2x8x32xf32, #tpu.memory_space<vmem>>, vector<2x8x32xf32>
    %1 = vector.shape_cast %0 : vector<2x8x32xf32> to vector<16x32xf32>
    %c0_2 = arith.constant 0 : index
    %c0_3 = arith.constant 0 : index
    %2 = vector.load %arg2[%c0_2, %c0_3] : memref<32x32xf32, #tpu.memory_space<vmem>>, vector<32x32xf32>
    %cst = arith.constant dense<0.000000e+00> : vector<16x32xf32>
    %3 = tpu.matmul %1, %2, %cst {dimension_numbers = #tpu.dot_dimension_numbers<[1], [0], [0], [1], [0, 0, 1, 1], [], []>} : vector<16x32xf32>, vector<32x32xf32>, vector<16x32xf32> -> vector<16x32xf32>
    %c0_4 = arith.constant 0 : index
    %c0_5 = arith.constant 0 : index
    %4 = vector.load %arg3[%c0_4, %c0_5] : memref<1x32xf32, #tpu.memory_space<vmem>>, vector<1x32xf32>
    %5 = vector.broadcast %4 : vector<1x32xf32> to vector<16x32xf32>
    %6 = arith.addf %3, %5 : vector<16x32xf32>
    %7 = math.tanh %6 : vector<16x32xf32>
    %c0_6 = arith.constant 0 : index
    %c0_7 = arith.constant 0 : index
    %8 = vector.load %arg4[%c0_6, %c0_7] : memref<32x1xf32, #tpu.memory_space<vmem>>, vector<32x1xf32>
    %cst_8 = arith.constant dense<0.000000e+00> : vector<16x1xf32>
    %9 = tpu.matmul %7, %8, %cst_8 {dimension_numbers = #tpu.dot_dimension_numbers<[1], [0], [0], [1], [0, 0, 1, 1], [], []>} : vector<16x32xf32>, vector<32x1xf32>, vector<16x1xf32> -> vector<16x1xf32>
    %10 = vector.shape_cast %9 : vector<16x1xf32> to vector<2x8x1xf32>
    %11 = tpu.transpose %10, [0, 2, 1] : vector<2x8x1xf32> -> vector<2x1x8xf32>
    %cst_9 = arith.constant dense<0xFF800000> : vector<2x1xf32>
    %12 = vector.multi_reduction <maximumf>, %11, %cst_9 [2] : vector<2x1x8xf32> to vector<2x1xf32>
    %13 = vector.shape_cast %12 : vector<2x1xf32> to vector<2x1x1xf32>
    %14 = vector.broadcast %13 : vector<2x1x1xf32> to vector<2x1x8xf32>
    %15 = arith.subf %11, %14 : vector<2x1x8xf32>
    %16 = math.exp %15 : vector<2x1x8xf32>
    %cst_10 = arith.constant dense<0.000000e+00> : vector<2x1xf32>
    %17 = vector.multi_reduction <add>, %16, %cst_10 [2] : vector<2x1x8xf32> to vector<2x1xf32>
    %18 = vector.shape_cast %17 : vector<2x1xf32> to vector<2x1x1xf32>
    %19 = tpu.reciprocal %18 {approx = true} : vector<2x1x1xf32> -> vector<2x1x1xf32>
    %20 = arith.mulf %18, %19 : vector<2x1x1xf32>
    %cst_11 = arith.constant 2.000000e+00 : f32
    %21 = vector.broadcast %cst_11 : f32 to vector<2x1x1xf32>
    %22 = arith.subf %21, %20 : vector<2x1x1xf32>
    %23 = arith.mulf %19, %22 : vector<2x1x1xf32>
    %24 = vector.broadcast %23 : vector<2x1x1xf32> to vector<2x1x8xf32>
    %25 = arith.mulf %16, %24 : vector<2x1x8xf32>
    "tpu.trace_start"() <{level = 10 : i32, message = "bqs,bsh->bqh"}> : () -> ()
    %cst_12 = arith.constant dense<0.000000e+00> : vector<2x1x32xf32>
    %26 = tpu.matmul %25, %0, %cst_12 {dimension_numbers = #tpu.dot_dimension_numbers<[2], [1], [1], [2], [0, 0, 0, 1, 1, 2], [0], [0]>} : vector<2x1x8xf32>, vector<2x8x32xf32>, vector<2x1x32xf32> -> vector<2x1x32xf32>
    "tpu.trace_stop"() : () -> ()
    %27 = vector.shape_cast %26 : vector<2x1x32xf32> to vector<2x32xf32>
    %c0_13 = arith.constant 0 : index
    %c0_14 = arith.constant 0 : index
    %28 = vector.load %arg5[%c0_13, %c0_14] : memref<2x32xf32, #tpu.memory_space<vmem>>, vector<2x32xf32>
    tpu.vector_store %arg5[%c0_13, %c0_14], %27 {strides = array<i32>} : memref<2x32xf32, #tpu.memory_space<vmem>>, vector<2x32xf32>,
    %29 = vector.shape_cast %25 : vector<2x1x8xf32> to vector<2x8xf32>
    %c0_15 = arith.constant 0 : index
    %c0_16 = arith.constant 0 : index
    %30 = vector.load %arg6[%c0_15, %c0_16] : memref<2x8xf32, #tpu.memory_space<vmem>>, vector<2x8xf32>
    tpu.vector_store %arg6[%c0_15, %c0_16], %29 {strides = array<i32>} : memref<2x8xf32, #tpu.memory_space<vmem>>, vector<2x8xf32>,
    return
  }
  func.func @transform_0(%arg0: i32) -> (i32, i32, i32) {
    %c0_i32 = arith.constant 0 : i32
    %c0_i32_0 = arith.constant 0 : i32
    %c0_i32_1 = arith.constant 0 : i32
    return %arg0, %c0_i32, %c0_i32_0 : i32, i32, i32
  }
  func.func @transform_1(%arg0: i32) -> (i32, i32) {
    %c0_i32 = arith.constant 0 : i32
    %c0_i32_0 = arith.constant 0 : i32
    %c0_i32_1 = arith.constant 0 : i32
    return %c0_i32, %c0_i32_0 : i32, i32
  }
  func.func @transform_2(%arg0: i32) -> (i32, i32) {
    %c0_i32 = arith.constant 0 : i32
    %c0_i32_0 = arith.constant 0 : i32
    %c0_i32_1 = arith.constant 0 : i32
    return %c0_i32, %c0_i32_0 : i32, i32
  }
  func.func @transform_3(%arg0: i32) -> (i32, i32) {
    %c0_i32 = arith.constant 0 : i32
    %c0_i32_0 = arith.constant 0 : i32
    %c0_i32_1 = arith.constant 0 : i32
    return %c0_i32, %c0_i32_0 : i32, i32
  }
  func.func @transform_4(%arg0: i32) -> (i32, i32) {
    %c0_i32 = arith.constant 0 : i32
    %c0_i32_0 = arith.constant 0 : i32
    return %arg0, %c0_i32 : i32, i32
  }
  func.func @transform_5(%arg0: i32) -> (i32, i32) {
    %c0_i32 = arith.constant 0 : i32
    %c0_i32_0 = arith.constant 0 : i32
    return %arg0, %c0_i32 : i32, i32
  }
}

</mosaic_0001>

<llo_original>
// kernel: tpu_custom_call.1
$region0: #{tpu_custom_call.1}
  #allocation0 [shape = 'u32[]', space=smem, size = 0x4, offset = 0x4, fixed_abs, tag = 'smem constant byte address 0x4 - core index']
  #allocation1 [shape = 'u32[72,128]{1,0:T(1,128)}', space=vmem, size = 0x9000, scoped, tag = 'internal scratch']
  %s0 = inlined_call_operand.hbm [shape: f32[2,8,32], index: 0, kind: input, shape index: {}]
  %s1 = inlined_call_operand.vmem [shape: f32[32,32], index: 1, kind: input, shape index: {}]
  %s2 = inlined_call_operand.vmem [shape: f32[1,32], index: 2, kind: input, shape index: {}]
  %s3 = inlined_call_operand.vmem [shape: f32[32,1], index: 3, kind: input, shape index: {}]
  %s4 = inlined_call_operand.hbm [shape: f32[2,32], index: 4, kind: output, shape index: {0}]
  %s5 = inlined_call_operand.hbm [shape: f32[2,8], index: 5, kind: output, shape index: {1}]
  %6 = xla_tuple %s4, %s5
  %s7 = sld [smem:[#allocation0]]
  $region38: #{tpu_custom_call.1} parent=0
    _
  %s9 = ssub.s32 1, %s7
  %s10 = scalar_select 0, %s9, %s7
  $region1: #{tpu_custom_call.1} parent=0
    #allocation2 [shape = 'u8[8192]{0}', space=vmem, size = 0x2000, scoped, tag = 'input window, operand 0, single buffered']
    #allocation3 [shape = 's32[1]{0}', space=sflag, size = 0x4, scoped, tag = 'scoped memory for tpu_custom_call.1']
    #allocation4 [shape = 's32[1]{0}', space=sflag, size = 0x4, scoped, tag = 'scoped memory for tpu_custom_call.1']
    #allocation5 [shape = 'u8[1024]{0}', space=vmem, size = 0x400, scoped, tag = 'output window, operand 0, single buffered']
    #allocation6 [shape = 'u8[1024]{0}', space=vmem, size = 0x400, scoped, tag = 'output window, operand 1, single buffered']
    #allocation7 [shape = 's32[1]{0}', space=sflag, size = 0x4, scoped, tag = 'scoped memory for tpu_custom_call.1']
    %11 = vsyncpa [#allocation3], 0
    %12 = vsyncpa [#allocation4], 0
    %13 = vsyncpa [#allocation7], 0
    // Predicated region
    $region2: #{tpu_custom_call.1} parent=1 // pred_check
      _
    $region3: #{tpu_custom_call.1} parent=1 // pred_check_branch
      %15 = sbr.rel (0) target = $region5
    $region4: #{tpu_custom_call.1} parent=1 // pred_region
      %17 = vsyncadd [#allocation3], 0
      %s18 = sshll.u32 %s0, 4
      %s19 = int_to_ptr.hbm [resolvable:$true] %s18
      %s20 = sshll.u32 [#allocation2], 4
      %s21 = int_to_ptr.vmem [resolvable:$true] %s20
      %26 = dma.hbm_to_vmem [thread:$0]  %s19, 256, %s21, [#allocation3], 128, 128, 8
    $region5: #{tpu_custom_call.1} parent=1 // pred_fallthru
      _
    // Predicated region
    $region6: #{tpu_custom_call.1} parent=1 // pred_check
      _
    $region7: #{tpu_custom_call.1} parent=1 // pred_check_branch
      %28 = sbr.rel (0) target = $region9
    $region8: #{tpu_custom_call.1} parent=1 // pred_region
      _
    $region9: #{tpu_custom_call.1} parent=1 // pred_fallthru
      _
    // Predicated region
    $region10: #{tpu_custom_call.1} parent=1 // pred_check
      _
    $region11: #{tpu_custom_call.1} parent=1 // pred_check_branch
      %30 = sbr.rel (0) target = $region13
    $region12: #{tpu_custom_call.1} parent=1 // pred_region
      _
    $region13: #{tpu_custom_call.1} parent=1 // pred_fallthru
      _
    // Predicated region
    $region14: #{tpu_custom_call.1} parent=1 // pred_check
      _
    $region15: #{tpu_custom_call.1} parent=1 // pred_check_branch
      %32 = sbr.rel (0) target = $region17
    $region16: #{tpu_custom_call.1} parent=1 // pred_region
      _
    $region17: #{tpu_custom_call.1} parent=1 // pred_fallthru
      _
    // Predicated region
    $region18: #{tpu_custom_call.1} parent=1 // pred_check
      _
    $region19: #{tpu_custom_call.1} parent=1 // pred_check_branch
      %34 = sbr.rel (0) target = $region21
    $region20: #{tpu_custom_call.1} parent=1 // pred_region
      %36 = dma.done [#allocation3], 256
    $region21: #{tpu_custom_call.1} parent=1 // pred_fallthru
      _
    %v37 = vld [vmem:[#allocation2] sm:$0xff]
    %v38 = vld [vmem:[#allocation2 + $0x8] sm:$0xff]
    %v39 = vld [vmem:[%s1] sm:$0xff]
    %v40 = vld [vmem:[%s1 + $0x8] sm:$0xff]
    %v41 = vld [vmem:[%s1 + $0x10] sm:$0xff]
    %v42 = vld [vmem:[%s1 + $0x18] sm:$0xff]
    %v43 = vld [vmem:[%s2] sm:$0x1]
    %v45 = vperm.slane %v43, 0
    %vm47 = vcmask 261120
    %v49 = vsel %vm47, %v37, 0
    %v52 = vsel %vm47, %v38, 0
    %54 = vmatpush.msra.mxu0 0.0
    %55 = vmatpush.msra.mxu0 0.0
    %56 = vmatpush.msra.mxu0 0.0
    %57 = vmatpush.msra.mxu0 0.0
    %58 = vmatpush.msra.mxu0 0.0
    %59 = vmatpush.msra.mxu0 0.0
    %60 = vmatpush.msra.mxu0 0.0
    %61 = vmatpush.msra.mxu0 0.0
    %62 = vmatpush.msra.mxu0 0.0
    %63 = vmatpush.msra.mxu0 0.0
    %64 = vmatpush.msra.mxu0 0.0
    %65 = vmatpush.msra.mxu0 0.0
    %66 = vmatpush.msra.mxu0 %v42
    %67 = vmatpush.msra.mxu0 %v41
    %68 = vmatpush.msra.mxu0 %v40
    %69 = vmatpush.msra.mxu0 %v39
    %70 = vmatmul.f32.gmra.mxu0 %v49
    %v71 = vpop.f32.mrf.mxu0
    %v72 = vadd.f32 %v45, %v71
    %73 = vmatmul.f32.gmra.mxu0 %v52
    %v74 = vpop.f32.mrf.mxu0
    %v75 = vadd.f32 %v45, %v74
    %76 = vdwg.mxu0
    %v77 = vtanh.pop %v72
    %v78 = vtanh.pop %v75
    %v79 = vld [vmem:[%s3] sm:$0xff]
    %v80 = vld [vmem:[%s3 + $0x8] sm:$0xff]
    %v81 = vld [vmem:[%s3 + $0x10] sm:$0xff]
    %v82 = vld [vmem:[%s3 + $0x18] sm:$0xff]
    %v84 = vsel %vm47, %v77, 0
    %v87 = vsel %vm47, %v78, 0
    %89 = vmatpush.msra.mxu0 0.0
    %90 = vmatpush.msra.mxu0 0.0
    %91 = vmatpush.msra.mxu0 0.0
    %92 = vmatpush.msra.mxu0 0.0
    %93 = vmatpush.msra.mxu0 0.0
    %94 = vmatpush.msra.mxu0 0.0
    %95 = vmatpush.msra.mxu0 0.0
    %96 = vmatpush.msra.mxu0 0.0
    %97 = vmatpush.msra.mxu0 0.0
    %98 = vmatpush.msra.mxu0 0.0
    %99 = vmatpush.msra.mxu0 0.0
    %100 = vmatpush.msra.mxu0 0.0
    %101 = vmatpush.msra.mxu0 %v82
    %102 = vmatpush.msra.mxu0 %v81
    %103 = vmatpush.msra.mxu0 %v80
    %104 = vmatpush.msra.mxu0 %v79
    %105 = vmatmul.f32.gmra.mxu0 %v84
    %v106 = vpop.f32.mrf.mxu0
    %v107 = vadd.f32 0.0, %v106
    %108 = vmatmul.f32.gmra.mxu0 %v87
    %v109 = vpop.f32.mrf.mxu0
    %v110 = vadd.f32 0.0, %v109
    %111 = vdwg.mxu0
    %112 = vxpose.xlu0.b32.start [1/16] %v107, 128
    %113 = vxpose.xlu0.b32.cont [2/16] 0.0, 128
    %114 = vxpose.xlu0.b32.cont [3/16] 0.0, 128
    %115 = vxpose.xlu0.b32.cont [4/16] 0.0, 128
    %116 = vxpose.xlu0.b32.cont [5/16] 0.0, 128
    %117 = vxpose.xlu0.b32.cont [6/16] 0.0, 128
    %118 = vxpose.xlu0.b32.cont [7/16] 0.0, 128
    %119 = vxpose.xlu0.b32.cont [8/16] 0.0, 128
    %120 = vxpose.xlu0.b32.cont [9/16] 0.0, 128
    %121 = vxpose.xlu0.b32.cont [10/16] 0.0, 128
    %122 = vxpose.xlu0.b32.cont [11/16] 0.0, 128
    %123 = vxpose.xlu0.b32.cont [12/16] 0.0, 128
    %124 = vxpose.xlu0.b32.cont [13/16] 0.0, 128
    %125 = vxpose.xlu0.b32.cont [14/16] 0.0, 128
    %126 = vxpose.xlu0.b32.cont [15/16] 0.0, 128
    %127 = vxpose.xlu0.b32.end [16/16] 0.0, 128
    %v128 = vpop.trf.xlu0
    %v129 = vpop.trf.xlu0
    %v130 = vpop.trf.xlu0
    %v131 = vpop.trf.xlu0
    %v132 = vpop.trf.xlu0
    %v133 = vpop.trf.xlu0
    %v134 = vpop.trf.xlu0
    %v135 = vpop.trf.xlu0
    %v136 = vpop.trf.xlu0
    %v137 = vpop.trf.xlu0
    %v138 = vpop.trf.xlu0
    %v139 = vpop.trf.xlu0
    %v140 = vpop.trf.xlu0
    %v141 = vpop.trf.xlu0
    %v142 = vpop.trf.xlu0
    %v143 = vpop.trf.xlu0
    %144 = vxpose.xlu0.b32.start [1/16] %v110, 128
    %145 = vxpose.xlu0.b32.cont [2/16] 0.0, 128
    %146 = vxpose.xlu0.b32.cont [3/16] 0.0, 128
    %147 = vxpose.xlu0.b32.cont [4/16] 0.0, 128
    %148 = vxpose.xlu0.b32.cont [5/16] 0.0, 128
    %149 = vxpose.xlu0.b32.cont [6/16] 0.0, 128
    %150 = vxpose.xlu0.b32.cont [7/16] 0.0, 128
    %151 = vxpose.xlu0.b32.cont [8/16] 0.0, 128
    %152 = vxpose.xlu0.b32.cont [9/16] 0.0, 128
    %153 = vxpose.xlu0.b32.cont [10/16] 0.0, 128
    %154 = vxpose.xlu0.b32.cont [11/16] 0.0, 128
    %155 = vxpose.xlu0.b32.cont [12/16] 0.0, 128
    %156 = vxpose.xlu0.b32.cont [13/16] 0.0, 128
    %157 = vxpose.xlu0.b32.cont [14/16] 0.0, 128
    %158 = vxpose.xlu0.b32.cont [15/16] 0.0, 128
    %159 = vxpose.xlu0.b32.end [16/16] 0.0, 128
    %v160 = vpop.trf.xlu0
    %v161 = vpop.trf.xlu0
    %v162 = vpop.trf.xlu0
    %v163 = vpop.trf.xlu0
    %v164 = vpop.trf.xlu0
    %v165 = vpop.trf.xlu0
    %v166 = vpop.trf.xlu0
    %v167 = vpop.trf.xlu0
    %v168 = vpop.trf.xlu0
    %v169 = vpop.trf.xlu0
    %v170 = vpop.trf.xlu0
    %v171 = vpop.trf.xlu0
    %v172 = vpop.trf.xlu0
    %v173 = vpop.trf.xlu0
    %v174 = vpop.trf.xlu0
    %v175 = vpop.trf.xlu0
    %vm176 = vcmask 57344
    %v177 = vsel %vm176, %v128, -inf
    %178 = vmax.xlane.f32.xlu0 %v177
    %v179 = vpop.xlane.xlu0 %178
    %v180 = vsel %vm176, %v160, -inf
    %181 = vmax.xlane.f32.xlu0 %v180
    %v182 = vpop.xlane.xlu0 %181
    %v183 = vsub.f32 %v128, %v179
    %v184 = vsub.f32 %v160, %v182
    %v185 = vmul.f32 %v183, 1.442695
    %v186 = vpow.pop %v185
    %v187 = vmul.f32 %v184, 1.442695
    %v188 = vpow.pop %v187
    %v189 = vsel %vm176, %v186, 0.0
    %190 = vadd.xlane.f32.xlu0 %v189
    %v191 = vpop.xlane.xlu0 %190
    %v192 = vsel %vm176, %v188, 0.0
    %193 = vadd.xlane.f32.xlu0 %v192
    %v194 = vpop.xlane.xlu0 %193
    %v195 = vrcp.pop %v191
    %v196 = vrcp.pop %v194
    %v197 = vmul.f32 %v191, %v195
    %v198 = vmul.f32 %v194, %v196
    %v199 = vsub.f32 2.0, %v197
    %v200 = vsub.f32 2.0, %v198
    %v201 = vmul.f32 %v195, %v199
    %v202 = vmul.f32 %v196, %v200
    %v203 = vmul.f32 %v186, %v201
    %v204 = vmul.f32 %v188, %v202
    %vm205 = vcmask 64512
    %v207 = vsel %vm205, %v203, 0
    %209 = vmatpush.msra.mxu0 0.0
    %210 = vmatpush.msra.mxu0 0.0
    %211 = vmatpush.msra.mxu0 0.0
    %212 = vmatpush.msra.mxu0 0.0
    %213 = vmatpush.msra.mxu0 0.0
    %214 = vmatpush.msra.mxu0 0.0
    %215 = vmatpush.msra.mxu0 0.0
    %216 = vmatpush.msra.mxu0 0.0
    %217 = vmatpush.msra.mxu0 0.0
    %218 = vmatpush.msra.mxu0 0.0
    %219 = vmatpush.msra.mxu0 0.0
    %220 = vmatpush.msra.mxu0 0.0
    %221 = vmatpush.msra.mxu0 0.0
    %222 = vmatpush.msra.mxu0 0.0
    %223 = vmatpush.msra.mxu0 0.0
    %224 = vmatpush.msra.mxu0 %v37
    %225 = vmatmul.f32.gmra.mxu0 %v207
    %v226 = vpop.f32.mrf.mxu0
    %v227 = vadd.f32 0.0, %v226
    %228 = vdwg.mxu0
    %v230 = vsel %vm205, %v204, 0
    %232 = vmatpush.msra.mxu0 0.0
    %233 = vmatpush.msra.mxu0 0.0
    %234 = vmatpush.msra.mxu0 0.0
    %235 = vmatpush.msra.mxu0 0.0
    %236 = vmatpush.msra.mxu0 0.0
    %237 = vmatpush.msra.mxu0 0.0
    %238 = vmatpush.msra.mxu0 0.0
    %239 = vmatpush.msra.mxu0 0.0
    %240 = vmatpush.msra.mxu0 0.0
    %241 = vmatpush.msra.mxu0 0.0
    %242 = vmatpush.msra.mxu0 0.0
    %243 = vmatpush.msra.mxu0 0.0
    %244 = vmatpush.msra.mxu0 0.0
    %245 = vmatpush.msra.mxu0 0.0
    %246 = vmatpush.msra.mxu0 0.0
    %247 = vmatpush.msra.mxu0 %v38
    %248 = vmatmul.f32.gmra.mxu0 %v230
    %v249 = vpop.f32.mrf.mxu0
    %v250 = vadd.f32 0.0, %v249
    %251 = vdwg.mxu0
    %v254 = vrot.slane %v250, 7
    %vm255 = vcmask 1041409
    %v256 = vsel %vm255, %v254, %v227
    %vm258 = vcmask 254976
    %259 = vst.msk [vmem:[#allocation5] sm:$0x3] %vm258, %v256
    %v260 = vrot.slane %v204, 7
    %v261 = vsel %vm255, %v260, %v203
    %vm263 = vcmask 58368
    %264 = vst.msk [vmem:[#allocation6] sm:$0x3] %vm263, %v261
    // Predicated region
    $region22: #{tpu_custom_call.1} parent=1 // pred_check
      _
    $region23: #{tpu_custom_call.1} parent=1 // pred_check_branch
      %266 = sbr.rel (0) target = $region25
    $region24: #{tpu_custom_call.1} parent=1 // pred_region
      %268 = vsyncadd [#allocation4], 0
      %s270 = sshll.u32 [#allocation5], 4
      %s271 = int_to_ptr.vmem [resolvable:$true] %s270
      %s272 = sshll.u32 %s4, 4
      %s273 = int_to_ptr.hbm [resolvable:$true] %s272
      %275 = dma.vmem_to_hbm [thread:$0]  %s271, 32, %s273, [#allocation4]
    $region25: #{tpu_custom_call.1} parent=1 // pred_fallthru
      _
    // Predicated region
    $region26: #{tpu_custom_call.1} parent=1 // pred_check
      _
    $region27: #{tpu_custom_call.1} parent=1 // pred_check_branch
      %277 = sbr.rel (0) target = $region29
    $region28: #{tpu_custom_call.1} parent=1 // pred_region
      %279 = vsyncadd [#allocation7], 0
      %s281 = sshll.u32 [#allocation6], 4
      %s282 = int_to_ptr.vmem [resolvable:$true] %s281
      %s283 = sshll.u32 %s5, 4
      %s284 = int_to_ptr.hbm [resolvable:$true] %s283
      %286 = dma.vmem_to_hbm [thread:$0]  %s282, 32, %s284, [#allocation7]
    $region29: #{tpu_custom_call.1} parent=1 // pred_fallthru
      _
    // Predicated region
    $region30: #{tpu_custom_call.1} parent=1 // pred_check
      _
    $region31: #{tpu_custom_call.1} parent=1 // pred_check_branch
      %288 = sbr.rel (0) target = $region33
    $region32: #{tpu_custom_call.1} parent=1 // pred_region
      %290 = dma.done [#allocation4], 32
    $region33: #{tpu_custom_call.1} parent=1 // pred_fallthru
      _
    // Predicated region
    $region34: #{tpu_custom_call.1} parent=1 // pred_check
      _
    $region35: #{tpu_custom_call.1} parent=1 // pred_check_branch
      %292 = sbr.rel (0) target = $region37
    $region36: #{tpu_custom_call.1} parent=1 // pred_region
      %294 = dma.done [#allocation7], 32
    $region37: #{tpu_custom_call.1} parent=1 // pred_fallthru
      _
    %295 = vsyncpa [#allocation3], 1
    %296 = vsyncpa [#allocation4], 1
    %297 = vsyncpa [#allocation7], 1

</llo_original>
